<compile_context>
chip_gen: v6e
topology: v6e:2x2x1
jax: 0.10.0
libtpu: 0.0.40
codegen_flags: <defaults>
</compile_context>

<pallas_src>
import jax
import jax.numpy as jnp
from jax.experimental import pallas as pl
from jax.experimental.pallas import tpu as pltpu


LANES = 512  # slab width; multiple of 128 -> contiguous DMAs, unmasked stores


def _xelu_kernel(w_ref, x_ref, o_ref):
    # w_ref: SMEM (5,) f32 parameters [w0, w1, w2, w3, w4]
    # x_ref / o_ref: VMEM (TM, LANES) tiles in the caller's dtype
    x = x_ref[...].astype(jnp.float32)
    w0 = w_ref[0]
    w1 = w_ref[1]
    w2 = w_ref[2]
    w3 = w_ref[3]
    w4 = w_ref[4]

    # neg = -relu(-x) * w1  == min(x, 0) * w1
    neg = jnp.minimum(x, 0.0) * w1
    # pos = relu(x) * w2    == max(x, 0) * w2
    pos = jnp.maximum(x, 0.0) * w2
    # far_neg = where(neg > -1, neg, neg * w0)
    far_neg = jnp.where(neg > -1.0, neg, neg * w0)
    # far_pos = where(pos < 1, pos, pos * w3)
    far_pos = jnp.where(pos < 1.0, pos, pos * w3)
    o_ref[...] = (far_pos + far_neg + w4).astype(o_ref.dtype)


def _vmem_budget():
    """Return (tile_bytes_target, vmem_limit_bytes) tuned per TPU generation.

    Default is safe everywhere (v7x has only 64 MiB physical VMEM per TC:
    4 x 8 MiB buffers under a 48 MiB scoped limit).  On parts with 128 MiB
    VMEM (v5e / v6e) we grow tiles to ~12 MiB and the limit to 64 MiB.
    """
    tile_bytes, limit = 8 << 20, 48 << 20
    try:
        info = pltpu.get_tpu_info()
        if info.vmem_capacity_bytes >= (100 << 20):  # v5e / v6e: 128 MiB VMEM
            tile_bytes, limit = 12 << 20, 64 << 20
    except Exception:
        pass  # unknown chip / query unavailable -> keep the conservative setting
    return tile_bytes, limit


def xelu_pallas(x: jax.Array, weight: jax.Array) -> jax.Array:
    """Apply XeLU elementwise.  x: any shape (e.g. NCHW).  weight: (5,)."""
    assert weight.shape == (5,)
    orig_shape = x.shape
    orig_dtype = x.dtype

    n = x.size
    itemsize = jnp.dtype(orig_dtype).itemsize

    flat = x.reshape(-1)  # contiguous reshape: no copy

    # Only pad when n does not divide the slab width (<= LANES-1 extra elems).
    # TODO(synk): a separate tail path would avoid even this (rare) extra pass.
    rem = n % LANES
    needs_pad = rem != 0  # static Python check
    if needs_pad:
        flat = jnp.pad(flat, (0, LANES - rem))
    rows = flat.size // LANES
    x2d = flat.reshape(rows, LANES)

    # Tile rows sized by bytes, rounded down to a multiple of 32 (covers
    # f32 (8,128) / bf16 (16,128) / int8-fp8 (32,128) native packing).
    tile_bytes, vmem_limit = _vmem_budget()
    tm_target = max(32, (tile_bytes // (LANES * itemsize)) // 32 * 32)

    if rows <= tm_target:
        # Single block covering the full array (block == full dims is always
        # legal) -- no row padding for small inputs.
        TM = rows
        grid = (1,)
    else:
        TM = tm_target
        # Partial last block (if rows % TM != 0) is masked by Pallas; no pad.
        grid = (pl.cdiv(rows, TM),)

    cost = pl.CostEstimate(
        flops=8 * n,
        transcendentals=0,
        bytes_accessed=2 * n * itemsize,  # pure streaming: read + write
    )

    out2d = pl.pallas_call(
        _xelu_kernel,
        out_shape=jax.ShapeDtypeStruct((rows, LANES), orig_dtype),
        grid_spec=pltpu.PrefetchScalarGridSpec(
            num_scalar_prefetch=0,
            grid=grid,
            in_specs=[
                pl.BlockSpec(memory_space=pltpu.MemorySpace.SMEM),  # weights
                pl.BlockSpec((TM, LANES), lambda i: (i, 0)),        # x tile
            ],
            out_specs=pl.BlockSpec((TM, LANES), lambda i: (i, 0)),
        ),
        compiler_params=pltpu.CompilerParams(
            dimension_semantics=("parallel",),
            vmem_limit_bytes=vmem_limit,
        ),
        cost_estimate=cost,
    )(weight.astype(jnp.float32), x2d)

    out = out2d.reshape(-1)
    if needs_pad:
        out = out[:n]
    return out.reshape(orig_shape)


def xelu_ref(x, weight):
    # Pure-JAX reference mirroring the PyTorch forward exactly.
    neg = -jnp.maximum(-x, 0.0) * weight[1]
    pos = jnp.maximum(x, 0.0) * weight[2]
    far_neg = jnp.where(neg > -1.0, neg, neg * weight[0])
    far_pos = jnp.where(pos < 1.0, pos, pos * weight[3])
    return far_pos + far_neg + weight[-1]


if __name__ == "__main__":
    key = jax.random.PRNGKey(0)
    # Deterministic parameter init, exactly as in XeLU.__init__.
    weight = jnp.array([0.8, 0.3, 1.0, 0.8, 0.0], dtype=jnp.float32)

    # NCHW input; scale so both |x|<1 and |x|>1 branches are hit.
    x = jax.random.normal(key, (2, 4, 16, 16), dtype=jnp.float32) * 3.0
    y = jax.block_until_ready(xelu_pallas(x, weight))
    y_ref = xelu_ref(x, weight)
    assert y.shape == x.shape and y.dtype == x.dtype
    assert jnp.allclose(y, y_ref, atol=1e-6, rtol=1e-6), "mismatch vs reference"

    # Ragged element count (n % 512 != 0) to exercise the tail path.
    x2 = jax.random.normal(jax.random.PRNGKey(1), (3, 5, 7, 11), jnp.float32) * 3.0
    y2 = jax.block_until_ready(xelu_pallas(x2, weight))
    assert y2.shape == x2.shape
    assert jnp.allclose(y2, xelu_ref(x2, weight), atol=1e-6, rtol=1e-6)

    print("KERNEL_OK")
</pallas_src>

<mosaic_0001>
module attributes {stable_mosaic.version = 11 : i64} {
  func.func @_xelu_kernel(%arg0: i32, %arg1: memref<5xf32, #tpu.memory_space<smem>>, %arg2: memref<4x512xf32, #tpu.memory_space<vmem>>, %arg3: memref<4x512xf32, #tpu.memory_space<vmem>>) attributes {dimension_semantics = [#tpu.dimension_semantics<parallel>], iteration_bounds = array<i64: 1>, scalar_prefetch = 0 : i64, scratch_operands = 0 : i64, tpu.core_type = #tpu.core_type<tc>, window_params = [{transform_indices = @transform_0, window_bounds = array<i64: 5>}, {transform_indices = @transform_1, window_bounds = array<i64: 4, 512>}, {transform_indices = @transform_2, window_bounds = array<i64: 4, 512>}]} {
    %c0 = arith.constant 0 : index
    %c0_0 = arith.constant 0 : index
    %0 = vector.load %arg2[%c0, %c0_0] : memref<4x512xf32, #tpu.memory_space<vmem>>, vector<4x512xf32>
    %c0_1 = arith.constant 0 : index
    %1 = memref.load %arg1[%c0_1] : memref<5xf32, #tpu.memory_space<smem>>
    %c1 = arith.constant 1 : index
    %2 = memref.load %arg1[%c1] : memref<5xf32, #tpu.memory_space<smem>>
    %c2 = arith.constant 2 : index
    %3 = memref.load %arg1[%c2] : memref<5xf32, #tpu.memory_space<smem>>
    %c3 = arith.constant 3 : index
    %4 = memref.load %arg1[%c3] : memref<5xf32, #tpu.memory_space<smem>>
    %c4 = arith.constant 4 : index
    %5 = memref.load %arg1[%c4] : memref<5xf32, #tpu.memory_space<smem>>
    %cst = arith.constant 0.000000e+00 : f32
    %6 = vector.broadcast %cst : f32 to vector<4x512xf32>
    %7 = arith.minimumf %0, %6 : vector<4x512xf32>
    %8 = vector.broadcast %2 : f32 to vector<4x512xf32>
    %9 = arith.mulf %7, %8 : vector<4x512xf32>
    %cst_2 = arith.constant 0.000000e+00 : f32
    %10 = vector.broadcast %cst_2 : f32 to vector<4x512xf32>
    %11 = arith.maximumf %0, %10 : vector<4x512xf32>
    %12 = vector.broadcast %3 : f32 to vector<4x512xf32>
    %13 = arith.mulf %11, %12 : vector<4x512xf32>
    %cst_3 = arith.constant -1.000000e+00 : f32
    %14 = vector.broadcast %cst_3 : f32 to vector<4x512xf32>
    %15 = arith.cmpf ogt, %9, %14 : vector<4x512xf32>
    %16 = vector.broadcast %1 : f32 to vector<4x512xf32>
    %17 = arith.mulf %9, %16 : vector<4x512xf32>
    %18 = arith.select %15, %9, %17 : vector<4x512xi1>, vector<4x512xf32>
    %cst_4 = arith.constant 1.000000e+00 : f32
    %19 = vector.broadcast %cst_4 : f32 to vector<4x512xf32>
    %20 = arith.cmpf olt, %13, %19 : vector<4x512xf32>
    %21 = vector.broadcast %4 : f32 to vector<4x512xf32>
    %22 = arith.mulf %13, %21 : vector<4x512xf32>
    %23 = arith.select %20, %13, %22 : vector<4x512xi1>, vector<4x512xf32>
    %24 = arith.addf %23, %18 : vector<4x512xf32>
    %25 = vector.broadcast %5 : f32 to vector<4x512xf32>
    %26 = arith.addf %24, %25 : vector<4x512xf32>
    %c0_5 = arith.constant 0 : index
    %c0_6 = arith.constant 0 : index
    %27 = vector.load %arg3[%c0_5, %c0_6] : memref<4x512xf32, #tpu.memory_space<vmem>>, vector<4x512xf32>
    tpu.vector_store %arg3[%c0_5, %c0_6], %26 {strides = array<i32>} : memref<4x512xf32, #tpu.memory_space<vmem>>, vector<4x512xf32>,
    return
  }
  func.func @transform_0(%arg0: i32) -> i32 {
    %c0_i32 = arith.constant 0 : i32
    %c0_i32_0 = arith.constant 0 : i32
    return %c0_i32 : i32
  }
  func.func @transform_1(%arg0: i32) -> (i32, i32) {
    %c0_i32 = arith.constant 0 : i32
    %c0_i32_0 = arith.constant 0 : i32
    return %arg0, %c0_i32 : i32, i32
  }
  func.func @transform_2(%arg0: i32) -> (i32, i32) {
    %c0_i32 = arith.constant 0 : i32
    %c0_i32_0 = arith.constant 0 : i32
    return %arg0, %c0_i32 : i32, i32
  }
}

</mosaic_0001>

<llo_original>
// kernel: tpu_custom_call.1
$region0: #{tpu_custom_call.1}
  #allocation0 [shape = 'u32[]', space=smem, size = 0x4, offset = 0x4, fixed_abs, tag = 'smem constant byte address 0x4 - core index']
  #allocation1 [shape = 'u32[144,128]{1,0:T(1,128)}', space=vmem, size = 0x12000, scoped, tag = 'internal scratch']
  %s0 = inlined_call_operand.hbm [shape: f32[5], index: 0, kind: input, shape index: {}]
  %s1 = inlined_call_operand.hbm [shape: f32[4,512], index: 1, kind: input, shape index: {}]
  %s2 = inlined_call_operand.hbm [shape: f32[4,512], index: 2, kind: output, shape index: {}]
  %s3 = sld [smem:[#allocation0]]
  $region26: #{tpu_custom_call.1} parent=0
    _
  %s5 = ssub.s32 1, %s3
  %s6 = scalar_select 0, %s5, %s3
  $region1: #{tpu_custom_call.1} parent=0
    #allocation2 [shape = 'u8[512]{0}', space=smem, size = 0x200, scoped, tag = 'input window, operand 0, single buffered']
    #allocation3 [shape = 's32[1]{0}', space=sflag, size = 0x4, scoped, tag = 'scoped memory for tpu_custom_call.1']
    #allocation4 [shape = 's32[1]{0}', space=sflag, size = 0x4, scoped, tag = 'scoped memory for tpu_custom_call.1']
    #allocation5 [shape = 's32[1]{0}', space=sflag, size = 0x4, scoped, tag = 'scoped memory for tpu_custom_call.1']
    #allocation6 [shape = 'u8[8192]{0}', space=vmem, size = 0x2000, scoped, tag = 'input window, operand 1, single buffered']
    #allocation7 [shape = 'u8[8192]{0}', space=vmem, size = 0x2000, scoped, tag = 'output window, operand 0, single buffered']
    %7 = vsyncpa [#allocation5], 0
    %8 = vsyncpa [#allocation3], 0
    %9 = vsyncpa [#allocation4], 0
    // Predicated region
    $region2: #{tpu_custom_call.1} parent=1 // pred_check
      _
    $region3: #{tpu_custom_call.1} parent=1 // pred_check_branch
      %11 = sbr.rel (0) target = $region5
    $region4: #{tpu_custom_call.1} parent=1 // pred_region
      %s13 = ssub.s32 16, 16
      %14 = vsyncadd [#allocation5], %s13
      %17 = dma.hbm_to_smem %s0, 16, [#allocation2], [#allocation5]
    $region5: #{tpu_custom_call.1} parent=1 // pred_fallthru
      _
    // Predicated region
    $region6: #{tpu_custom_call.1} parent=1 // pred_check
      _
    $region7: #{tpu_custom_call.1} parent=1 // pred_check_branch
      %19 = sbr.rel (0) target = $region9
    $region8: #{tpu_custom_call.1} parent=1 // pred_region
      %s21 = ssub.s32 256, 256
      %22 = vsyncadd [#allocation3], %s21
      %s24 = sshll.u32 [#allocation6], 4
      %s25 = int_to_ptr.vmem [resolvable:$true] %s24
      %27 = dma.hbm_to_vmem [thread:$0]  %s1, 256, %s25, [#allocation3]
    $region9: #{tpu_custom_call.1} parent=1 // pred_fallthru
      _
    // Predicated region
    $region10: #{tpu_custom_call.1} parent=1 // pred_check
      _
    $region11: #{tpu_custom_call.1} parent=1 // pred_check_branch
      %29 = sbr.rel (0) target = $region13
    $region12: #{tpu_custom_call.1} parent=1 // pred_region
      %30 = dma.done [#allocation5], 16
    $region13: #{tpu_custom_call.1} parent=1 // pred_fallthru
      _
    // Predicated region
    $region14: #{tpu_custom_call.1} parent=1 // pred_check
      _
    $region15: #{tpu_custom_call.1} parent=1 // pred_check_branch
      %32 = sbr.rel (0) target = $region17
    $region16: #{tpu_custom_call.1} parent=1 // pred_region
      %33 = dma.done [#allocation3], 256
    $region17: #{tpu_custom_call.1} parent=1 // pred_fallthru
      _
    %34 = sfence
    %v35 = vld [vmem:[#allocation6] sm:$0xff]
    %v36 = vld [vmem:[#allocation6 + $0x8] sm:$0xff]
    %s37 = sld [smem:[#allocation2]]
    %s38 = sld [smem:[#allocation2 + $0x1]]
    %s39 = sld [smem:[#allocation2 + $0x2]]
    %s40 = sld [smem:[#allocation2 + $0x3]]
    %s41 = sld [smem:[#allocation2 + $0x4]]
    %v42 = vmin.f32 %v35, 0.0
    %v43 = vmin.f32 %v36, 0.0
    %v44 = vstv %s38
    %v45 = vmul.f32 %v42, %v44
    %v46 = vmul.f32 %v43, %v44
    %v47 = vmax.f32 %v35, 0.0
    %v48 = vmax.f32 %v36, 0.0
    %v49 = vstv %s39
    %v50 = vmul.f32 %v47, %v49
    %v51 = vmul.f32 %v48, %v49
    %vm52 = vcmp.gt.f32.partialorder %v45, -1.0
    %vm53 = vcmp.gt.f32.partialorder %v46, -1.0
    %v54 = vstv %s37
    %v55 = vmul.f32 %v45, %v54
    %v56 = vmul.f32 %v46, %v54
    %v57 = vsel %vm52, %v45, %v55
    %v58 = vsel %vm53, %v46, %v56
    %vm59 = vcmp.lt.f32.partialorder %v50, 1.0
    %vm60 = vcmp.lt.f32.partialorder %v51, 1.0
    %v61 = vstv %s40
    %v62 = vmul.f32 %v50, %v61
    %v63 = vmul.f32 %v51, %v61
    %v64 = vsel %vm59, %v50, %v62
    %v65 = vsel %vm60, %v51, %v63
    %v66 = vadd.f32 %v64, %v57
    %v67 = vadd.f32 %v65, %v58
    %v68 = vstv %s41
    %v69 = vadd.f32 %v66, %v68
    %v70 = vadd.f32 %v67, %v68
    %71 = vst [vmem:[#allocation7] sm:$0xff] %v69
    %72 = vst [vmem:[#allocation7 + $0x8] sm:$0xff] %v70
    // Predicated region
    $region18: #{tpu_custom_call.1} parent=1 // pred_check
      _
    $region19: #{tpu_custom_call.1} parent=1 // pred_check_branch
      %74 = sbr.rel (0) target = $region21
    $region20: #{tpu_custom_call.1} parent=1 // pred_region
      %s76 = ssub.s32 256, 256
      %77 = vsyncadd [#allocation4], %s76
      %s79 = sshll.u32 [#allocation7], 4
      %s80 = int_to_ptr.vmem [resolvable:$true] %s79
      %82 = dma.vmem_to_hbm [thread:$0]  %s80, 256, %s2, [#allocation4]
    $region21: #{tpu_custom_call.1} parent=1 // pred_fallthru
      _
    // Predicated region
    $region22: #{tpu_custom_call.1} parent=1 // pred_check
      _
    $region23: #{tpu_custom_call.1} parent=1 // pred_check_branch
      %84 = sbr.rel (0) target = $region25
    $region24: #{tpu_custom_call.1} parent=1 // pred_region
      %85 = dma.done [#allocation4], 256
    $region25: #{tpu_custom_call.1} parent=1 // pred_fallthru
      _
    %86 = vsyncpa [#allocation3], 1
    %87 = vsyncpa [#allocation4], 1
    %88 = vsyncpa [#allocation5], 1

</llo_original>
